<compile_context>
chip_gen: v7x
topology: tpu7x:2x2x1
jax: 0.10.0
libtpu: 0.0.40
codegen_flags: <defaults>
</compile_context>

<pallas_src>
import jax
import jax.numpy as jnp
import numpy as np
from jax.experimental import pallas as pl
from jax.experimental.pallas import tpu as pltpu

BN_EPS = 1e-5
_SUB = 1024                # lanes per in-kernel sub-chunk (static slices, VPU adds)
_MAX_SUB_PER_STEP = 128    # bounds the static unroll per grid step (td <= 128*_SUB)


# ----------------------------------------------------------------------------
# Kernel
# ----------------------------------------------------------------------------
def _make_head_kernel(*, td, sub, k_per, d_total, needs_mask):
    """Kernel for one (B, td) tile of x and (1, td) tile of folded weights.

    o_ref is the (1, B, 128) per-parallel-slice accumulator (resident across
    the trailing reduction axis); every lane holds the same running sum.
    """
    n_sub = td // sub

    def kernel(x_ref, w_ref, o_ref):
        p = pl.program_id(0)
        k = pl.program_id(1)

        @pl.when(k == 0)
        def _():
            o_ref[...] = jnp.zeros_like(o_ref)

        b = x_ref.shape[0]
        if needs_mask:
            chunk_base = (p * k_per + k) * td            # logical element offset
            lane = jax.lax.broadcasted_iota(jnp.int32, (b, sub), 1)

        acc = jnp.zeros((b, sub), jnp.float32)
        for c in range(n_sub):                           # static 128-aligned slices
            off = c * sub
            xs = x_ref[:, off:off + sub].astype(jnp.float32)
            ws = w_ref[:, off:off + sub].astype(jnp.float32)
            prod = xs * ws
            if needs_mask:
                prod = jnp.where(chunk_base + off + lane < d_total, prod, 0.0)
            acc = acc + prod

        partial = jnp.sum(acc, axis=-1, keepdims=True)   # (B, 1): single lane reduce
        o_ref[...] += partial[None].astype(o_ref.dtype)  # broadcast into (1, B, 128)

    return kernel


# ----------------------------------------------------------------------------
# Planning (generation-aware tile sizes / VMEM limit)
# ----------------------------------------------------------------------------
def _vmem_capacity_bytes():
    try:
        info = pltpu.get_tpu_info()
        cap = int(getattr(info, "vmem_capacity_bytes", 0) or 0)
        if cap > 0:
            return cap
    except Exception:
        pass
    return 64 << 20  # conservative fallback (v7x per-TC VMEM)


def _plan(batch, d, x_itemsize, max_td=None):
    vmem_cap = _vmem_capacity_bytes()
    # <= 48 MiB on v7x (64 MiB/TC), 64 MiB on v5e/v6e (128 MiB).
    vmem_limit = int(max(32 << 20, min((vmem_cap * 3) // 4, 64 << 20)))

    d128 = pl.cdiv(d, 128) * 128
    budget = max(vmem_limit - (4 << 20), 4 << 20)
    # bytes per feature lane: double-buffered x + double-buffered w + f32 temps.
    per_lane = 2 * batch * x_itemsize + 8 + 4 * batch
    td = min(budget // per_lane,
             (4 << 20) // max(1, batch * x_itemsize),   # ~4 MiB per x buffer
             _MAX_SUB_PER_STEP * _SUB,                   # bound static unroll
             d128)
    if max_td is not None:
        td = min(td, max_td)
    td = max(128, (td // 128) * 128)
    sub = min(_SUB, td)
    td = (td // sub) * sub                               # sub divides td

    n_chunks = pl.cdiv(d, td)
    p = 2 if n_chunks >= 2 else 1                        # feeds both v7x TCs
    k_per = pl.cdiv(n_chunks, p)
    return td, sub, p, k_per, n_chunks, vmem_limit


# ----------------------------------------------------------------------------
# Parameter folding:  BN(eval) -> BN(eval) -> Dropout(eval) -> Linear(D, 1)
# ----------------------------------------------------------------------------
def fold_head_params(params):
    """Fold the two eval-mode BatchNorms + Linear into (w_eff (1,D), b_eff ())."""
    f32 = jnp.float32
    g1, b1 = params["g1"].astype(f32), params["b1"].astype(f32)
    m1, v1 = params["m1"].astype(f32), params["v1"].astype(f32)
    g2, b2 = params["g2"].astype(f32), params["b2"].astype(f32)
    m2, v2 = params["m2"].astype(f32), params["v2"].astype(f32)
    w = params["w"].astype(f32)

    inv1 = jax.lax.rsqrt(v1 + BN_EPS)
    inv2 = jax.lax.rsqrt(v2 + BN_EPS)
    scale = inv1 * g1 * inv2 * g2                               # (1, D)
    offset = (b1 - m1 * inv1 * g1 - m2) * inv2 * g2 + b2        # (1, D)

    w_eff = (w * scale).reshape(1, -1)                          # (1, D)
    b_eff = params["bias"].astype(f32)[0] + jnp.sum(offset * w)  # scalar
    return w_eff, b_eff


# ----------------------------------------------------------------------------
# Wrapper
# ----------------------------------------------------------------------------
def fused_classification_head(x, w_eff, b_eff, *, max_td=None):
    """x: (B, D) flattened features (f32 or bf16).  Returns (B, 1) f32 logits."""
    x = jnp.asarray(x)
    B, D = x.shape
    w_eff = jnp.asarray(w_eff, jnp.float32).reshape(1, D)

    td, sub, P, K_per, n_chunks, vmem_limit = _plan(B, D, x.dtype.itemsize, max_td)
    d_cover = P * K_per * td
    needs_mask = d_cover != D

    # Only the tiny (1, D) folded-weight vector is padded (zeros); x is never copied.
    if d_cover != D:
        w_eff = jnp.pad(w_eff, ((0, 0), (0, d_cover - D)))

    kernel = _make_head_kernel(td=td, sub=sub, k_per=K_per, d_total=D,
                               needs_mask=needs_mask)

    out = pl.pallas_call(
        kernel,
        out_shape=jax.ShapeDtypeStruct((P, B, 128), jnp.float32),
        grid_spec=pltpu.PrefetchScalarGridSpec(
            num_scalar_prefetch=0,
            grid=(P, K_per),
            in_specs=[
                # x: full batch in one block (no sublane padding needed); feature
                # block index is self-clamped, the in-kernel mask zeroes any
                # duplicated / out-of-range tail read.
                pl.BlockSpec((B, td),
                             lambda p, k: (0, jnp.minimum(p * K_per + k,
                                                          n_chunks - 1))),
                # folded weights: padded to d_cover, always in-bounds.
                pl.BlockSpec((1, td), lambda p, k: (0, p * K_per + k)),
            ],
            out_specs=pl.BlockSpec((1, B, 128), lambda p, k: (p, 0, 0)),
        ),
        compiler_params=pltpu.CompilerParams(
            dimension_semantics=("parallel", "arbitrary"),
            vmem_limit_bytes=vmem_limit,
        ),
    )(x, w_eff)

    # Combine per-core partials, add folded bias, return (B, 1).
    return jnp.sum(out[:, :, 0], axis=0)[:, None] + b_eff


# ----------------------------------------------------------------------------
# Plain-JAX reference (unfolded) and synthetic feature extractor
# ----------------------------------------------------------------------------
def reference_head(x, params):
    y = (x - params["m1"]) / jnp.sqrt(params["v1"] + BN_EPS) * params["g1"] + params["b1"]
    z = (y - params["m2"]) / jnp.sqrt(params["v2"] + BN_EPS) * params["g2"] + params["b2"]
    return jnp.sum(z * params["w"], axis=-1, keepdims=True) + params["bias"][0]


def synthetic_feature_extractor(source, w_feat, *, frame):
    # TODO(synk): the real pretrained wav2vec2 encoder is an external checkpoint;
    # this deterministic stand-in produces outputs['features'] of shape (B, T, C).
    B, L = source.shape
    T = L // frame
    frames = source.reshape(B, T, frame)
    return jnp.tanh(jnp.einsum("btf,fc->btc", frames, w_feat))


# ----------------------------------------------------------------------------
# Demo / self-check
# ----------------------------------------------------------------------------
if __name__ == "__main__":
    key = jax.random.PRNGKey(0)

    def make_params(k, D):
        ks = jax.random.split(k, 10)
        return {
            "g1": jax.random.normal(ks[0], (1, D), jnp.float32) * 0.1 + 1.0,
            "b1": jax.random.normal(ks[1], (1, D), jnp.float32) * 0.1,
            "m1": jax.random.normal(ks[2], (1, D), jnp.float32) * 0.1,
            "v1": jax.random.uniform(ks[3], (1, D), jnp.float32, 0.5, 1.5),
            "g2": jax.random.normal(ks[4], (1, D), jnp.float32) * 0.1 + 1.0,
            "b2": jax.random.normal(ks[5], (1, D), jnp.float32) * 0.1,
            "m2": jax.random.normal(ks[6], (1, D), jnp.float32) * 0.1,
            "v2": jax.random.uniform(ks[7], (1, D), jnp.float32, 0.5, 1.5),
            "w": jax.random.normal(ks[8], (1, D), jnp.float32) / np.sqrt(D),
            "bias": jax.random.normal(ks[9], (1,), jnp.float32) * 0.01,
        }

    # --- main check: full forward at small shapes ---------------------------
    B, T, C, FRAME = 2, 16, 16, 32           # features (B, T, C); D = T*C = 256
    D = T * C
    L = T * FRAME
    k0, k1, k2 = jax.random.split(key, 3)
    source = jax.random.normal(k0, (B, L), jnp.float32)
    w_feat = jax.random.normal(k1, (FRAME, C), jnp.float32) * 0.1
    params = make_params(k2, D)

    features = synthetic_feature_extractor(source, w_feat, frame=FRAME)
    x_flat = features.reshape(B, -1)                       # (B, D)

    w_eff, b_eff = fold_head_params(params)                # hoisted (computed once)
    logits = jax.block_until_ready(fused_classification_head(x_flat, w_eff, b_eff))
    ref = reference_head(x_flat, params)
    np.testing.assert_allclose(np.asarray(logits), np.asarray(ref),
                               rtol=1e-4, atol=1e-4)
    assert logits.shape == (B, 1)

    # --- extra checks: unpadded D tail, multi-chunk grid, 2-way parallel axis
    for (Bx, Dx, mtd) in [(4, 2500, None), (2, 2500, 1024)]:
        kk = jax.random.fold_in(key, Bx * Dx + (mtd or 0))
        ka, kb = jax.random.split(kk)
        xx = jax.random.normal(ka, (Bx, Dx), jnp.float32)
        pp = make_params(kb, Dx)
        we, be = fold_head_params(pp)
        got = jax.block_until_ready(
            fused_classification_head(xx, we, be, max_td=mtd))
        np.testing.assert_allclose(np.asarray(got),
                                   np.asarray(reference_head(xx, pp)),
                                   rtol=5e-4, atol=5e-4)

    print("KERNEL_OK")
</pallas_src>

<mosaic_0001>
module attributes {stable_mosaic.version = 11 : i64} {
  func.func @kernel(%arg0: i32, %arg1: i32, %arg2: memref<2x256xf32, #tpu.memory_space<vmem>>, %arg3: memref<1x256xf32, #tpu.memory_space<vmem>>, %arg4: memref<1x2x128xf32, #tpu.memory_space<vmem>>) attributes {dimension_semantics = [#tpu.dimension_semantics<parallel>, #tpu.dimension_semantics<arbitrary>], iteration_bounds = array<i64: 1, 1>, scalar_prefetch = 0 : i64, scratch_operands = 0 : i64, tpu.core_type = #tpu.core_type<tc>, window_params = [{transform_indices = @transform_0, window_bounds = array<i64: 2, 256>}, {transform_indices = @transform_1, window_bounds = array<i64: 1, 256>}, {transform_indices = @transform_2, window_bounds = array<i64: 1, 2, 128>}]} {
    %c0_i32 = arith.constant 0 : i32
    %0 = arith.cmpi eq, %arg1, %c0_i32 : i32
    %1 = arith.extui %0 : i1 to i32
    %c0_i32_0 = arith.constant 0 : i32
    %2 = arith.cmpi ne, %1, %c0_i32_0 : i32
    scf.if %2 {
      %cst_11 = arith.constant 0.000000e+00 : f32
      %16 = vector.broadcast %cst_11 : f32 to vector<1x2x128xf32>
      %c0_12 = arith.constant 0 : index
      %c0_13 = arith.constant 0 : index
      %c0_14 = arith.constant 0 : index
      %17 = vector.load %arg4[%c0_12, %c0_13, %c0_14] : memref<1x2x128xf32, #tpu.memory_space<vmem>>, vector<1x2x128xf32>
      tpu.vector_store %arg4[%c0_12, %c0_13, %c0_14], %16 {strides = array<i32>} : memref<1x2x128xf32, #tpu.memory_space<vmem>>, vector<1x2x128xf32>,
    } else {
    }
    %cst = arith.constant 0.000000e+00 : f32
    %3 = vector.broadcast %cst : f32 to vector<2x256xf32>
    %c0 = arith.constant 0 : index
    %c0_1 = arith.constant 0 : index
    %4 = vector.load %arg2[%c0, %c0_1] : memref<2x256xf32, #tpu.memory_space<vmem>>, vector<2x256xf32>
    %c0_2 = arith.constant 0 : index
    %c0_3 = arith.constant 0 : index
    %5 = vector.load %arg3[%c0_2, %c0_3] : memref<1x256xf32, #tpu.memory_space<vmem>>, vector<1x256xf32>
    %6 = vector.broadcast %5 : vector<1x256xf32> to vector<2x256xf32>
    %7 = arith.mulf %4, %6 : vector<2x256xf32>
    %8 = arith.addf %3, %7 : vector<2x256xf32>
    %cst_4 = arith.constant dense<0.000000e+00> : vector<2xf32>
    %9 = vector.multi_reduction <add>, %8, %cst_4 [1] : vector<2x256xf32> to vector<2xf32>
    %10 = vector.shape_cast %9 : vector<2xf32> to vector<2x1xf32>
    %c0_5 = arith.constant 0 : index
    %c0_6 = arith.constant 0 : index
    %c0_7 = arith.constant 0 : index
    %11 = vector.load %arg4[%c0_5, %c0_6, %c0_7] : memref<1x2x128xf32, #tpu.memory_space<vmem>>, vector<1x2x128xf32>
    %12 = vector.shape_cast %10 : vector<2x1xf32> to vector<1x2x1xf32>
    %13 = vector.broadcast %12 : vector<1x2x1xf32> to vector<1x2x128xf32>
    %14 = arith.addf %11, %13 : vector<1x2x128xf32>
    %c0_8 = arith.constant 0 : index
    %c0_9 = arith.constant 0 : index
    %c0_10 = arith.constant 0 : index
    %15 = vector.load %arg4[%c0_8, %c0_9, %c0_10] : memref<1x2x128xf32, #tpu.memory_space<vmem>>, vector<1x2x128xf32>
    tpu.vector_store %arg4[%c0_8, %c0_9, %c0_10], %14 {strides = array<i32>} : memref<1x2x128xf32, #tpu.memory_space<vmem>>, vector<1x2x128xf32>,
    return
  }
  func.func @transform_0(%arg0: i32, %arg1: i32) -> (i32, i32) {
    %c1_i32 = arith.constant 1 : i32
    %0 = arith.muli %arg0, %c1_i32 : i32
    %1 = arith.addi %0, %arg1 : i32
    %c0_i32 = arith.constant 0 : i32
    %2 = arith.minsi %1, %c0_i32 : i32
    %c0_i32_0 = arith.constant 0 : i32
    %c0_i32_1 = arith.constant 0 : i32
    return %c0_i32_0, %2 : i32, i32
  }
  func.func @transform_1(%arg0: i32, %arg1: i32) -> (i32, i32) {
    %c1_i32 = arith.constant 1 : i32
    %0 = arith.muli %arg0, %c1_i32 : i32
    %1 = arith.addi %0, %arg1 : i32
    %c0_i32 = arith.constant 0 : i32
    %c0_i32_0 = arith.constant 0 : i32
    return %c0_i32, %1 : i32, i32
  }
  func.func @transform_2(%arg0: i32, %arg1: i32) -> (i32, i32, i32) {
    %c0_i32 = arith.constant 0 : i32
    %c0_i32_0 = arith.constant 0 : i32
    %c0_i32_1 = arith.constant 0 : i32
    return %arg0, %c0_i32, %c0_i32_0 : i32, i32, i32
  }
}

</mosaic_0001>

<llo_original>
// kernel: tpu_custom_call.1
$region0: #{tpu_custom_call.1}
  #allocation0 [shape = 'u32[]', space=smem, size = 0x4, offset = 0x4, fixed_abs, tag = 'smem constant byte address 0x4 - core index']
  #allocation1 [shape = 'u32[144,128]{1,0:T(1,128)}', space=vmem, size = 0x12000, scoped, tag = 'internal scratch']
  %s0 = inlined_call_operand.hbm [shape: f32[2,256], index: 0, kind: input, shape index: {}]
  %s1 = inlined_call_operand.vmem [shape: f32[1,256], index: 1, kind: input, shape index: {}]
  %s2 = inlined_call_operand.hbm [shape: f32[1,2,128], index: 2, kind: output, shape index: {}]
  %s3 = sld [smem:[#allocation0]]
  $region26: #{tpu_custom_call.1} parent=0
    _
  %s5 = ssub.s32 1, %s3
  %s6 = scalar_select 0, %s5, %s3
  $region1: #{tpu_custom_call.1} parent=0
    #allocation2 [shape = 'u8[2048]{0}', space=vmem, size = 0x800, scoped, tag = 'input window, operand 0, single buffered']
    #allocation3 [shape = 's32[1]{0}', space=sflag, size = 0x4, scoped, tag = 'scoped memory for tpu_custom_call.1']
    #allocation4 [shape = 's32[1]{0}', space=sflag, size = 0x4, scoped, tag = 'scoped memory for tpu_custom_call.1']
    #allocation5 [shape = 'u8[1024]{0}', space=vmem, size = 0x400, scoped, tag = 'output window, operand 0, single buffered']
    %7 = vsyncpa [#allocation3], 0
    %8 = vsyncpa [#allocation4], 0
    // Predicated region
    $region2: #{tpu_custom_call.1} parent=1 // pred_check
      _
    $region3: #{tpu_custom_call.1} parent=1 // pred_check_branch
      %10 = sbr.rel (0) target = $region5
    $region4: #{tpu_custom_call.1} parent=1 // pred_region
      %s11 = sadd.s32 0, 0
      %p12 = scmp.lt.s32.totalorder %s11, 0
      %s13 = scalar_select %p12, %s11, 0
      %s14 = smul.u32 2, %s13
      %s16 = ssub.s32 64, 64
      %17 = vsyncadd [#allocation3], %s16
      %s18 = smul.addr %s14, 32
      %s19 = scalar_lea.hbm %s0, %s18
      %s21 = sshll.u32 [#allocation2], 4
      %s22 = int_to_ptr.vmem [resolvable:$true] %s21
      %24 = dma.hbm_to_vmem [thread:$0]  %s19, 64, %s22, [#allocation3]
    $region5: #{tpu_custom_call.1} parent=1 // pred_fallthru
      _
    // Predicated region
    $region6: #{tpu_custom_call.1} parent=1 // pred_check
      _
    $region7: #{tpu_custom_call.1} parent=1 // pred_check_branch
      %26 = sbr.rel (0) target = $region9
    $region8: #{tpu_custom_call.1} parent=1 // pred_region
      %s27 = sadd.s32 0, 0
      %s28 = smul.u32 2, %s27
      %p29 = scmp.lt.s32.totalorder %s28, 1
      %s30 = scalar_select %p29, %s28, 1
      %s31 = scalar_lea.vmem %s1, %s30
      %s32 = sadd.s32 0, 0
      %s33 = smul.u32 2, %s32
    $region9: #{tpu_custom_call.1} parent=1 // pred_fallthru
      _
    // Predicated region
    $region10: #{tpu_custom_call.1} parent=1 // pred_check
      _
    $region11: #{tpu_custom_call.1} parent=1 // pred_check_branch
      %35 = sbr.rel (0) target = $region13
    $region12: #{tpu_custom_call.1} parent=1 // pred_region
      %36 = dma.done [#allocation3], 64
    $region13: #{tpu_custom_call.1} parent=1 // pred_fallthru
      _
    %s37 = sadd.s32 0, 0
    %s38 = smul.u32 2, %s37
    %p39 = scmp.lt.s32.totalorder %s38, 1
    %s40 = scalar_select %p39, %s38, 1
    %s41 = scalar_lea.vmem %s1, %s40
    %s42 = sadd.s32 0, 0
    %p43 = scmp.lt.s32.totalorder %s42, 0
    %s44 = scalar_select %p43, %s42, 0
    %s45 = smul.u32 2, %s44
    %s46 = sadd.s32 0, 0
    %s47 = smul.u32 2, %s46
    %p48 = scmp.lt.s32.totalorder %s47, 1
    %s49 = scalar_select %p48, %s47, 1
    %s50 = scalar_lea.vmem %s1, %s49
    %s51 = sadd.s32 0, 0
    %s52 = smul.u32 2, %s51
    %p53 = scmp.eq.s32.totalorder 0, 0
    // Predicated region
    $region14: #{tpu_custom_call.1} parent=1 // pred_check
      %p54 = pneg %p53
    $region15: #{tpu_custom_call.1} parent=1 // pred_check_branch
      %56 = sbr.rel (%p54) target = $region17
    $region16: #{tpu_custom_call.1} parent=1 // pred_region
      %57 = vst [vmem:[#allocation5] sm:$0x3] 0.0
    $region17: #{tpu_custom_call.1} parent=1 // pred_fallthru
      _
    %v58 = vld [vmem:[#allocation2] sm:$0xf]
    %v59 = vld [vmem:[%s50] sm:$0x3]
    %v61 = vlaneseq
    %v62 = vshrl.u32 %v61, 7
    %v63 = vsub.s32 0, %v62
    %v64 = vrot.slane %v59, %v63
    %v65 = vlaneseq
    %v66 = vshrl.u32 %v65, 7
    %v67 = vsub.s32 1, %v66
    %v68 = vrot.slane %v59, %v67
    %v69 = vcombine.low %v64, %v68
    %v71 = vunpack.c.l.s4 1983009808
    %v72 = vunpack.c.0.s8 %v71
    %v73 = vlaneseq
    %v74 = vshrl.u32 %v73, 7
    %v75 = vsub.s32 %v72, %v74
    %v76 = vrot.slane %v69, %v75
    %v78 = vmul.f32 %v58, %v76
    %v79 = vadd.f32 %v78, 0.0
    %v82 = vunpack.c.l.s4 1983009808
    %v83 = vunpack.c.0.s8 %v82
    %v84 = vlaneseq
    %v85 = vshrl.u32 %v84, 7
    %v86 = vsub.s32 %v83, %v85
    %v87 = vrot.slane %v79, %v86
    %v88 = vcombine.high %v87, %v87
    %vm91 = vcmask 1041408
    %v92 = vsel %vm91, %v87, 0.0
    %v93 = vsel %vm91, %v88, 0.0
    %v94 = vadd.f32 %v92, %v93
    %95 = vadd.xlane.f32.xlu0 %v94
    %v96 = vpop.xlane.xlu0 %95
    %v97 = vld [vmem:[#allocation5] sm:$0x3]
    %v98 = vadd.f32 %v97, %v96
    %99 = vst [vmem:[#allocation5] sm:$0x3] %v98
    // Predicated region
    $region18: #{tpu_custom_call.1} parent=1 // pred_check
      _
    $region19: #{tpu_custom_call.1} parent=1 // pred_check_branch
      %101 = sbr.rel (0) target = $region21
    $region20: #{tpu_custom_call.1} parent=1 // pred_region
      %s103 = ssub.s32 32, 32
      %104 = vsyncadd [#allocation4], %s103
      %s106 = sshll.u32 [#allocation5], 4
      %s107 = int_to_ptr.vmem [resolvable:$true] %s106
      %109 = dma.vmem_to_hbm [thread:$0]  %s107, 32, %s2, [#allocation4]
    $region21: #{tpu_custom_call.1} parent=1 // pred_fallthru
      _
    // Predicated region
    $region22: #{tpu_custom_call.1} parent=1 // pred_check
      _
    $region23: #{tpu_custom_call.1} parent=1 // pred_check_branch
      %111 = sbr.rel (0) target = $region25
    $region24: #{tpu_custom_call.1} parent=1 // pred_region
      %112 = dma.done [#allocation4], 32
    $region25: #{tpu_custom_call.1} parent=1 // pred_fallthru
      _
    %113 = vsyncpa [#allocation3], 1
    %114 = vsyncpa [#allocation4], 1

</llo_original>
